<compile_context>
chip_gen: v6e
topology: v6e:2x2x1
jax: 0.10.0
libtpu: 0.0.40
codegen_flags: <defaults>
</compile_context>

<pallas_src>
import jax
import jax.numpy as jnp
from jax.experimental import pallas as pl
from jax.experimental.pallas import tpu as pltpu

_LN_EPS = 1e-5


def _round_up(x, m):
    return ((x + m - 1) // m) * m


def _vmem_capacity_bytes():
    try:
        return int(pltpu.get_tpu_info().vmem_capacity_bytes)
    except Exception:
        return 64 << 20  # conservative: v7x per-TensorCore VMEM


def _fused_epilogue(x, h, b, gamma, beta, out_dtype):
    """ReLU(h + b) + x residual, then LayerNorm over the last dim.

    One-pass statistics: the two cross-lane reductions (sum, sum-of-squares) are
    independent so they can overlap on the XLUs; gamma is folded into the rsqrt
    scale; var is clamped at 0 to guard against cancellation noise.
    """
    y = x + jnp.maximum(h + b, 0.0)
    inv_d = 1.0 / y.shape[-1]
    s1 = jnp.sum(y, axis=-1, keepdims=True)
    s2 = jnp.sum(y * y, axis=-1, keepdims=True)
    mean = s1 * inv_d
    var = jnp.maximum(s2 * inv_d - mean * mean, 0.0)
    inv = jax.lax.rsqrt(var + _LN_EPS)          # EUP rsqrt (free slot)
    return ((y - mean) * (inv * gamma) + beta).astype(out_dtype)


def _resident_kernel(x_ref, w_ref, b_ref, g_ref, bt_ref, o_ref):
    """One (tm, D) row tile with the full pre-transposed W^T resident in VMEM."""
    x = x_ref[...]                                            # kept for residual
    h = jnp.dot(x.astype(w_ref.dtype), w_ref[...],            # bf16 MXU fast path
                preferred_element_type=jnp.float32)           # f32 accumulation
    o_ref[...] = _fused_epilogue(x, h, b_ref[...], g_ref[...], bt_ref[...],
                                 o_ref.dtype)


def _ktiled_kernel(x_ref, w_ref, b_ref, g_ref, bt_ref, o_ref, acc_ref, xfull_ref):
    """Large-D path: grid=(rows, K).  Accumulates x-slab @ W^T-slab into a
    (tm, D) f32 scratch, stashes the x slabs for the residual, and runs the
    ReLU / residual / LayerNorm epilogue on the last K step."""
    k = pl.program_id(1)
    tk = x_ref.shape[-1]

    @pl.when(k == 0)
    def _():
        acc_ref[...] = jnp.zeros_like(acc_ref)

    x_slab = x_ref[...]                                       # (tm, tk)
    col = pl.multiple_of(k * tk, tk)
    xfull_ref[:, pl.ds(col, tk)] = x_slab                     # stash for residual
    acc_ref[...] += jnp.dot(x_slab.astype(w_ref.dtype), w_ref[...],
                            preferred_element_type=jnp.float32)

    @pl.when(k == pl.num_programs(1) - 1)
    def _():
        o_ref[...] = _fused_epilogue(xfull_ref[...], acc_ref[...], b_ref[...],
                                     g_ref[...], bt_ref[...], o_ref.dtype)


def prepare_weight(w, dtype=jnp.bfloat16):
    """Transpose (and optionally cast) the torch [out, in] Linear weight ONCE,
    outside the per-call path, so the kernel computes x @ W^T directly."""
    return jnp.asarray(w.T, dtype=dtype)


def base_residual_module(x, w_t, b, gamma, beta, *, tm=512, out_dtype=None,
                         use_k_tiled=None):
    """Fused out = LayerNorm(x + ReLU(x @ W^T + b)).

    x:            [M, D] (f32 or bf16; residual/LayerNorm math is f32)
    w_t:          [D, D] pre-transposed Linear weight (prepare_weight), f32/bf16
    b,gamma,beta: [D]
    out_dtype:    output dtype (default x.dtype); bf16 halves output HBM traffic
    use_k_tiled:  force (True/False) the K-tiled large-D path; default: auto.
    """
    M, D = x.shape
    assert w_t.shape == (D, D)
    out_dtype = out_dtype or x.dtype
    out_isz = jnp.dtype(out_dtype).itemsize
    w_isz = jnp.dtype(w_t.dtype).itemsize
    x_isz = jnp.dtype(x.dtype).itemsize

    b2 = b.reshape(1, D).astype(jnp.float32)
    g2 = gamma.reshape(1, D).astype(jnp.float32)
    bt2 = beta.reshape(1, D).astype(jnp.float32)

    vmem_cap = _vmem_capacity_bytes()
    vmem_budget = int(0.85 * vmem_cap)        # headroom for Mosaic internal scratch

    # ---- K tiling only when W^T can't comfortably stay resident -------------
    tk = None
    for cand in (512, 256, 128):
        if D % cand == 0 and D // cand >= 2:
            tk = cand
            break
    if use_k_tiled is None:
        use_k_tiled = (tk is not None) and (D * D * w_isz > vmem_budget // 3)
    use_k_tiled = bool(use_k_tiled and tk is not None)

    # ---- row tile: as large as fits; no host-side pad (edge block is masked) -
    tm_eff = max(8, min(_round_up(tm, 8), _round_up(M, 8)))
    if M >= 1024:
        # enough work: keep >=4 grid steps so both TensorCores (v7x megacore)
        # get >=2 pipelined steps each; for small M one step is cheaper.
        tm_eff = min(tm_eff, _round_up(pl.cdiv(M, 4), 8))

    def footprint(tm_):
        per_row = tm_ * D
        if use_k_tiled:
            return (2 * tm_ * tk * x_isz          # x slabs   (double-buffered)
                    + 2 * tk * D * w_isz          # W^T slabs (double-buffered)
                    + 2 * per_row * out_isz       # out tiles (double-buffered)
                    + 2 * per_row * 4             # acc + stashed-x scratch
                    + 3 * per_row * 4             # live f32 temporaries
                    + 8 * D * 4)
        return (2 * per_row * x_isz               # x tiles   (double-buffered)
                + 2 * per_row * out_isz           # out tiles (double-buffered)
                + D * D * w_isz                   # resident W^T (single-buffered)
                + 4 * per_row * 4                 # live temporaries (h, y, ...)
                + 8 * D * 4)

    while tm_eff > 8 and footprint(tm_eff) > vmem_budget:
        tm_eff = max(8, (tm_eff // 2) // 8 * 8)

    vmem_limit = int(max(32 << 20, 1.3 * footprint(tm_eff)))
    vmem_limit = min(vmem_limit, int(0.9 * vmem_cap))

    grid_rows = pl.cdiv(M, tm_eff)

    def _build_and_run(single_buffer_consts):
        def const_spec(shape, index_map):
            # Constant-index blocks: single buffer (double-buffering only wastes
            # VMEM since the block index never changes).
            if single_buffer_consts:
                return pl.BlockSpec(shape, index_map, pipeline_mode=pl.Buffered(1))
            return pl.BlockSpec(shape, index_map)

        if use_k_tiled:
            grid = (grid_rows, D // tk)
            in_specs = [
                pl.BlockSpec((tm_eff, tk), lambda i, k: (i, k)),   # x slab
                pl.BlockSpec((tk, D), lambda i, k: (k, 0)),        # W^T slab
                const_spec((1, D), lambda i, k: (0, 0)),           # bias
                const_spec((1, D), lambda i, k: (0, 0)),           # gamma
                const_spec((1, D), lambda i, k: (0, 0)),           # beta
            ]
            out_spec = pl.BlockSpec((tm_eff, D), lambda i, k: (i, 0))
            scratch = [pltpu.VMEM((tm_eff, D), jnp.float32),       # matmul acc
                       pltpu.VMEM((tm_eff, D), x.dtype)]           # stashed x
            kernel = _ktiled_kernel
            semantics = ("parallel", "arbitrary")
        else:
            grid = (grid_rows,)
            in_specs = [
                pl.BlockSpec((tm_eff, D), lambda i: (i, 0)),       # x tile
                const_spec((D, D), lambda i: (0, 0)),              # resident W^T
                const_spec((1, D), lambda i: (0, 0)),              # bias
                const_spec((1, D), lambda i: (0, 0)),              # gamma
                const_spec((1, D), lambda i: (0, 0)),              # beta
            ]
            out_spec = pl.BlockSpec((tm_eff, D), lambda i: (i, 0))
            scratch = []
            kernel = _resident_kernel
            semantics = ("parallel",)

        return pl.pallas_call(
            kernel,
            out_shape=jax.ShapeDtypeStruct((M, D), out_dtype),
            grid_spec=pltpu.PrefetchScalarGridSpec(
                num_scalar_prefetch=0,
                grid=grid,
                in_specs=in_specs,
                out_specs=out_spec,
                scratch_shapes=scratch,
            ),
            compiler_params=pltpu.CompilerParams(
                dimension_semantics=semantics,
                vmem_limit_bytes=vmem_limit,
            ),
        )(x, w_t, b2, g2, bt2)

    try:
        return _build_and_run(True)
    except Exception:
        # pl.Buffered(1) (single-buffered constant blocks) unsupported on this
        # jax/Mosaic build -- fall back to default double-buffered specs.
        return _build_and_run(False)


def reference(x, w, b, gamma, beta):
    h = jnp.maximum(jnp.dot(x, w.T, precision="highest") + b, 0.0)
    y = x + h
    mean = jnp.mean(y, axis=-1, keepdims=True)
    var = jnp.mean((y - mean) ** 2, axis=-1, keepdims=True)
    return (y - mean) / jnp.sqrt(var + _LN_EPS) * gamma + beta


if __name__ == "__main__":
    latent = 32
    batch = 8

    key = jax.random.PRNGKey(0)
    kx, kw, kb, kx2, kx3, kw3, kb3 = jax.random.split(key, 7)
    x = jax.random.normal(kx, (batch, latent), dtype=jnp.float32)
    bound = 1.0 / (latent ** 0.5)
    w = jax.random.uniform(kw, (latent, latent), minval=-bound, maxval=bound,
                           dtype=jnp.float32)
    b = jax.random.uniform(kb, (latent,), minval=-bound, maxval=bound,
                           dtype=jnp.float32)
    gamma = jnp.ones((latent,), dtype=jnp.float32)   # nn.LayerNorm weight init
    beta = jnp.zeros((latent,), dtype=jnp.float32)   # nn.LayerNorm bias init

    ref = reference(x, w, b, gamma, beta)

    # 1) f32 weights: tight check vs. nn.Module semantics (resident-weight path).
    w_t_f32 = prepare_weight(w, dtype=jnp.float32)
    out_f32 = jax.block_until_ready(base_residual_module(x, w_t_f32, b, gamma, beta))
    assert jnp.allclose(out_f32, ref, atol=3e-5, rtol=1e-4), "f32 path mismatch"

    # 2) bf16 MXU fast path + bf16 output (f32 accumulation / residual / LN math).
    w_t_bf16 = prepare_weight(w, dtype=jnp.bfloat16)
    out_bf16 = jax.block_until_ready(
        base_residual_module(x, w_t_bf16, b, gamma, beta, out_dtype=jnp.bfloat16))
    assert jnp.allclose(out_bf16.astype(jnp.float32), ref, atol=2e-2, rtol=2e-2), \
        "bf16 path mismatch"

    # 3) Ragged batch: exercises the no-pad masked edge block (no host pad/slice).
    x2 = jax.random.normal(kx2, (13, latent), dtype=jnp.float32)
    ref2 = reference(x2, w, b, gamma, beta)
    out2 = jax.block_until_ready(base_residual_module(x2, w_t_f32, b, gamma, beta))
    assert jnp.allclose(out2, ref2, atol=3e-5, rtol=1e-4), "ragged path mismatch"

    # 4) K-tiled large-D path (forced at a small shape to exercise it: D=256, tk=128).
    D3, M3 = 256, 32
    x3 = jax.random.normal(kx3, (M3, D3), dtype=jnp.float32)
    bound3 = 1.0 / (D3 ** 0.5)
    w3 = jax.random.uniform(kw3, (D3, D3), minval=-bound3, maxval=bound3,
                            dtype=jnp.float32)
    b3 = jax.random.uniform(kb3, (D3,), minval=-bound3, maxval=bound3,
                            dtype=jnp.float32)
    g3 = jnp.ones((D3,), dtype=jnp.float32)
    bt3 = jnp.zeros((D3,), dtype=jnp.float32)
    ref3 = reference(x3, w3, b3, g3, bt3)
    out3 = jax.block_until_ready(
        base_residual_module(x3, prepare_weight(w3, jnp.float32), b3, g3, bt3,
                             use_k_tiled=True))
    assert jnp.allclose(out3, ref3, atol=1e-4, rtol=1e-4), "k-tiled path mismatch"

    # TODO(synk): if the production latent dim really is ~32, fuse this op into a
    # neighboring kernel or pack 4 rows into a lane-dense 128-wide slab
    # (block-diagonal weight, segmented LayerNorm); a standalone call at D=32 is
    # launch/masked-store bound regardless of tiling.
    print("KERNEL_OK")
</pallas_src>

<mosaic_0001>
module attributes {stable_mosaic.version = 11 : i64} {
  func.func @_resident_kernel(%arg0: i32, %arg1: memref<8x32xf32, #tpu.memory_space<vmem>>, %arg2: memref<32x32xf32, #tpu.memory_space<vmem>>, %arg3: memref<1x32xf32, #tpu.memory_space<vmem>>, %arg4: memref<1x32xf32, #tpu.memory_space<vmem>>, %arg5: memref<1x32xf32, #tpu.memory_space<vmem>>, %arg6: memref<8x32xf32, #tpu.memory_space<vmem>>) attributes {dimension_semantics = [#tpu.dimension_semantics<parallel>], iteration_bounds = array<i64: 1>, scalar_prefetch = 0 : i64, scratch_operands = 0 : i64, tpu.core_type = #tpu.core_type<tc>, window_params = [{transform_indices = @transform_0, window_bounds = array<i64: 8, 32>}, {pipeline_mode = #tpu.pipeline_mode<synchronous>, transform_indices = @transform_1, window_bounds = array<i64: 32, 32>}, {pipeline_mode = #tpu.pipeline_mode<synchronous>, transform_indices = @transform_2, window_bounds = array<i64: 1, 32>}, {pipeline_mode = #tpu.pipeline_mode<synchronous>, transform_indices = @transform_3, window_bounds = array<i64: 1, 32>}, {pipeline_mode = #tpu.pipeline_mode<synchronous>, transform_indices = @transform_4, window_bounds = array<i64: 1, 32>}, {transform_indices = @transform_5, window_bounds = array<i64: 8, 32>}]} {
    %c0 = arith.constant 0 : index
    %c0_0 = arith.constant 0 : index
    %0 = vector.load %arg1[%c0, %c0_0] : memref<8x32xf32, #tpu.memory_space<vmem>>, vector<8x32xf32>
    %c0_1 = arith.constant 0 : index
    %c0_2 = arith.constant 0 : index
    %1 = vector.load %arg2[%c0_1, %c0_2] : memref<32x32xf32, #tpu.memory_space<vmem>>, vector<32x32xf32>
    %cst = arith.constant dense<0.000000e+00> : vector<8x32xf32>
    %2 = tpu.matmul %0, %1, %cst {dimension_numbers = #tpu.dot_dimension_numbers<[1], [0], [0], [1], [0, 0, 1, 1], [], []>} : vector<8x32xf32>, vector<32x32xf32>, vector<8x32xf32> -> vector<8x32xf32>
    %c0_3 = arith.constant 0 : index
    %c0_4 = arith.constant 0 : index
    %3 = vector.load %arg3[%c0_3, %c0_4] : memref<1x32xf32, #tpu.memory_space<vmem>>, vector<1x32xf32>
    %c0_5 = arith.constant 0 : index
    %c0_6 = arith.constant 0 : index
    %4 = vector.load %arg4[%c0_5, %c0_6] : memref<1x32xf32, #tpu.memory_space<vmem>>, vector<1x32xf32>
    %c0_7 = arith.constant 0 : index
    %c0_8 = arith.constant 0 : index
    %5 = vector.load %arg5[%c0_7, %c0_8] : memref<1x32xf32, #tpu.memory_space<vmem>>, vector<1x32xf32>
    %6 = vector.broadcast %3 : vector<1x32xf32> to vector<8x32xf32>
    %7 = arith.addf %2, %6 : vector<8x32xf32>
    %cst_9 = arith.constant 0.000000e+00 : f32
    %8 = vector.broadcast %cst_9 : f32 to vector<8x32xf32>
    %9 = arith.maximumf %7, %8 : vector<8x32xf32>
    %10 = arith.addf %0, %9 : vector<8x32xf32>
    %cst_10 = arith.constant dense<0.000000e+00> : vector<8xf32>
    %11 = vector.multi_reduction <add>, %10, %cst_10 [1] : vector<8x32xf32> to vector<8xf32>
    %12 = vector.shape_cast %11 : vector<8xf32> to vector<8x1xf32>
    %13 = arith.mulf %10, %10 : vector<8x32xf32>
    %cst_11 = arith.constant dense<0.000000e+00> : vector<8xf32>
    %14 = vector.multi_reduction <add>, %13, %cst_11 [1] : vector<8x32xf32> to vector<8xf32>
    %15 = vector.shape_cast %14 : vector<8xf32> to vector<8x1xf32>
    %cst_12 = arith.constant 3.125000e-02 : f32
    %16 = vector.broadcast %cst_12 : f32 to vector<8x1xf32>
    %17 = arith.mulf %12, %16 : vector<8x1xf32>
    %cst_13 = arith.constant 3.125000e-02 : f32
    %18 = vector.broadcast %cst_13 : f32 to vector<8x1xf32>
    %19 = arith.mulf %15, %18 : vector<8x1xf32>
    %20 = arith.mulf %17, %17 : vector<8x1xf32>
    %21 = arith.subf %19, %20 : vector<8x1xf32>
    %cst_14 = arith.constant 0.000000e+00 : f32
    %22 = vector.broadcast %cst_14 : f32 to vector<8x1xf32>
    %23 = arith.maximumf %21, %22 : vector<8x1xf32>
    %cst_15 = arith.constant 9.99999974E-6 : f32
    %24 = vector.broadcast %cst_15 : f32 to vector<8x1xf32>
    %25 = arith.addf %23, %24 : vector<8x1xf32>
    %26 = math.rsqrt %25 : vector<8x1xf32>
    %27 = vector.broadcast %17 : vector<8x1xf32> to vector<8x32xf32>
    %28 = arith.subf %10, %27 : vector<8x32xf32>
    %29 = vector.broadcast %26 : vector<8x1xf32> to vector<8x32xf32>
    %30 = vector.broadcast %4 : vector<1x32xf32> to vector<8x32xf32>
    %31 = arith.mulf %29, %30 : vector<8x32xf32>
    %32 = arith.mulf %28, %31 : vector<8x32xf32>
    %33 = vector.broadcast %5 : vector<1x32xf32> to vector<8x32xf32>
    %34 = arith.addf %32, %33 : vector<8x32xf32>
    %c0_16 = arith.constant 0 : index
    %c0_17 = arith.constant 0 : index
    %35 = vector.load %arg6[%c0_16, %c0_17] : memref<8x32xf32, #tpu.memory_space<vmem>>, vector<8x32xf32>
    tpu.vector_store %arg6[%c0_16, %c0_17], %34 {strides = array<i32>} : memref<8x32xf32, #tpu.memory_space<vmem>>, vector<8x32xf32>,
    return
  }
  func.func @transform_0(%arg0: i32) -> (i32, i32) {
    %c0_i32 = arith.constant 0 : i32
    %c0_i32_0 = arith.constant 0 : i32
    return %arg0, %c0_i32 : i32, i32
  }
  func.func @transform_1(%arg0: i32) -> (i32, i32) {
    %c0_i32 = arith.constant 0 : i32
    %c0_i32_0 = arith.constant 0 : i32
    %c0_i32_1 = arith.constant 0 : i32
    return %c0_i32, %c0_i32_0 : i32, i32
  }
  func.func @transform_2(%arg0: i32) -> (i32, i32) {
    %c0_i32 = arith.constant 0 : i32
    %c0_i32_0 = arith.constant 0 : i32
    %c0_i32_1 = arith.constant 0 : i32
    return %c0_i32, %c0_i32_0 : i32, i32
  }
  func.func @transform_3(%arg0: i32) -> (i32, i32) {
    %c0_i32 = arith.constant 0 : i32
    %c0_i32_0 = arith.constant 0 : i32
    %c0_i32_1 = arith.constant 0 : i32
    return %c0_i32, %c0_i32_0 : i32, i32
  }
  func.func @transform_4(%arg0: i32) -> (i32, i32) {
    %c0_i32 = arith.constant 0 : i32
    %c0_i32_0 = arith.constant 0 : i32
    %c0_i32_1 = arith.constant 0 : i32
    return %c0_i32, %c0_i32_0 : i32, i32
  }
  func.func @transform_5(%arg0: i32) -> (i32, i32) {
    %c0_i32 = arith.constant 0 : i32
    %c0_i32_0 = arith.constant 0 : i32
    return %arg0, %c0_i32 : i32, i32
  }
}

module attributes {stable_mosaic.version = 11 : i64} {
  func.func @_resident_kernel(%arg0: i32, %arg1: memref<8x32xf32, #tpu.memory_space<vmem>>, %arg2: memref<32x32xf32, #tpu.memory_space<vmem>>, %arg3: memref<1x32xf32, #tpu.memory_space<vmem>>, %arg4: memref<1x32xf32, #tpu.memory_space<vmem>>, %arg5: memref<1x32xf32, #tpu.memory_space<vmem>>, %arg6: memref<8x32xf32, #tpu.memory_space<vmem>>) attributes {dimension_semantics = [#tpu.dimension_semantics<parallel>], iteration_bounds = array<i64: 1>, scalar_prefetch = 0 : i64, scratch_operands = 0 : i64, tpu.core_type = #tpu.core_type<tc>, window_params = [{transform_indices = @transform_0, window_bounds = array<i64: 8, 32>}, {pipeline_mode = #tpu.pipeline_mode<synchronous>, transform_indices = @transform_1, window_bounds = array<i64: 32, 32>}, {pipeline_mode = #tpu.pipeline_mode<synchronous>, transform_indices = @transform_2, window_bounds = array<i64: 1, 32>}, {pipeline_mode = #tpu.pipeline_mode<synchronous>, transform_indices = @transform_3, window_bounds = array<i64: 1, 32>}, {pipeline_mode = #tpu.pipeline_mode<synchronous>, transform_indices = @transform_4, window_bounds = array<i64: 1, 32>}, {transform_indices = @transform_5, window_bounds = array<i64: 8, 32>}]} {
    %c0 = arith.constant 0 : index
    %c0_0 = arith.constant 0 : index
    %0 = vector.load %arg1[%c0, %c0_0] : memref<8x32xf32, #tpu.memory_space<vmem>>, vector<8x32xf32>
    %c0_1 = arith.constant 0 : index
    %c0_2 = arith.constant 0 : index
    %1 = vector.load %arg2[%c0_1, %c0_2] : memref<32x32xf32, #tpu.memory_space<vmem>>, vector<32x32xf32>
    %cst = arith.constant dense<0.000000e+00> : vector<8x32xf32>
    %2 = tpu.matmul %0, %1, %cst {dimension_numbers = #tpu.dot_dimension_numbers<[1], [0], [0], [1], [0, 0, 1, 1], [], []>} : vector<8x32xf32>, vector<32x32xf32>, vector<8x32xf32> -> vector<8x32xf32>
    %c0_3 = arith.constant 0 : index
    %c0_4 = arith.constant 0 : index
    %3 = vector.load %arg3[%c0_3, %c0_4] : memref<1x32xf32, #tpu.memory_space<vmem>>, vector<1x32xf32>
    %c0_5 = arith.constant 0 : index
    %c0_6 = arith.constant 0 : index
    %4 = vector.load %arg4[%c0_5, %c0_6] : memref<1x32xf32, #tpu.memory_space<vmem>>, vector<1x32xf32>
    %c0_7 = arith.constant 0 : index
    %c0_8 = arith.constant 0 : index
    %5 = vector.load %arg5[%c0_7, %c0_8] : memref<1x32xf32, #tpu.memory_space<vmem>>, vector<1x32xf32>
    %6 = vector.broadcast %3 : vector<1x32xf32> to vector<8x32xf32>
    %7 = arith.addf %2, %6 : vector<8x32xf32>
    %cst_9 = arith.constant 0.000000e+00 : f32
    %8 = vector.broadcast %cst_9 : f32 to vector<8x32xf32>
    %9 = arith.maximumf %7, %8 : vector<8x32xf32>
    %10 = arith.addf %0, %9 : vector<8x32xf32>
    %cst_10 = arith.constant dense<0.000000e+00> : vector<8xf32>
    %11 = vector.multi_reduction <add>, %10, %cst_10 [1] : vector<8x32xf32> to vector<8xf32>
    %12 = vector.shape_cast %11 : vector<8xf32> to vector<8x1xf32>
    %13 = arith.mulf %10, %10 : vector<8x32xf32>
    %cst_11 = arith.constant dense<0.000000e+00> : vector<8xf32>
    %14 = vector.multi_reduction <add>, %13, %cst_11 [1] : vector<8x32xf32> to vector<8xf32>
    %15 = vector.shape_cast %14 : vector<8xf32> to vector<8x1xf32>
    %cst_12 = arith.constant 3.125000e-02 : f32
    %16 = vector.broadcast %cst_12 : f32 to vector<8x1xf32>
    %17 = arith.mulf %12, %16 : vector<8x1xf32>
    %cst_13 = arith.constant 3.125000e-02 : f32
    %18 = vector.broadcast %cst_13 : f32 to vector<8x1xf32>
    %19 = arith.mulf %15, %18 : vector<8x1xf32>
    %20 = arith.mulf %17, %17 : vector<8x1xf32>
    %21 = arith.subf %19, %20 : vector<8x1xf32>
    %cst_14 = arith.constant 0.000000e+00 : f32
    %22 = vector.broadcast %cst_14 : f32 to vector<8x1xf32>
    %23 = arith.maximumf %21, %22 : vector<8x1xf32>
    %cst_15 = arith.constant 9.99999974E-6 : f32
    %24 = vector.broadcast %cst_15 : f32 to vector<8x1xf32>
    %25 = arith.addf %23, %24 : vector<8x1xf32>
    %26 = math.rsqrt %25 : vector<8x1xf32>
    %27 = vector.broadcast %17 : vector<8x1xf32> to vector<8x32xf32>
    %28 = arith.subf %10, %27 : vector<8x32xf32>
    %29 = vector.broadcast %26 : vector<8x1xf32> to vector<8x32xf32>
    %30 = vector.broadcast %4 : vector<1x32xf32> to vector<8x32xf32>
    %31 = arith.mulf %29, %30 : vector<8x32xf32>
    %32 = arith.mulf %28, %31 : vector<8x32xf32>
    %33 = vector.broadcast %5 : vector<1x32xf32> to vector<8x32xf32>
    %34 = arith.addf %32, %33 : vector<8x32xf32>
    %c0_16 = arith.constant 0 : index
    %c0_17 = arith.constant 0 : index
    %35 = vector.load %arg6[%c0_16, %c0_17] : memref<8x32xf32, #tpu.memory_space<vmem>>, vector<8x32xf32>
    tpu.vector_store %arg6[%c0_16, %c0_17], %34 {strides = array<i32>} : memref<8x32xf32, #tpu.memory_space<vmem>>, vector<8x32xf32>,
    return
  }
  func.func @transform_0(%arg0: i32) -> (i32, i32) {
    %c0_i32 = arith.constant 0 : i32
    %c0_i32_0 = arith.constant 0 : i32
    return %arg0, %c0_i32 : i32, i32
  }
  func.func @transform_1(%arg0: i32) -> (i32, i32) {
    %c0_i32 = arith.constant 0 : i32
    %c0_i32_0 = arith.constant 0 : i32
    %c0_i32_1 = arith.constant 0 : i32
    return %c0_i32, %c0_i32_0 : i32, i32
  }
  func.func @transform_2(%arg0: i32) -> (i32, i32) {
    %c0_i32 = arith.constant 0 : i32
    %c0_i32_0 = arith.constant 0 : i32
    %c0_i32_1 = arith.constant 0 : i32
    return %c0_i32, %c0_i32_0 : i32, i32
  }
  func.func @transform_3(%arg0: i32) -> (i32, i32) {
    %c0_i32 = arith.constant 0 : i32
    %c0_i32_0 = arith.constant 0 : i32
    %c0_i32_1 = arith.constant 0 : i32
    return %c0_i32, %c0_i32_0 : i32, i32
  }
  func.func @transform_4(%arg0: i32) -> (i32, i32) {
    %c0_i32 = arith.constant 0 : i32
    %c0_i32_0 = arith.constant 0 : i32
    %c0_i32_1 = arith.constant 0 : i32
    return %c0_i32, %c0_i32_0 : i32, i32
  }
  func.func @transform_5(%arg0: i32) -> (i32, i32) {
    %c0_i32 = arith.constant 0 : i32
    %c0_i32_0 = arith.constant 0 : i32
    return %arg0, %c0_i32 : i32, i32
  }
}

</mosaic_0001>

<llo_original>
// kernel: tpu_custom_call.1
$region0: #{tpu_custom_call.1}
  #allocation0 [shape = 'u32[]', space=smem, size = 0x4, offset = 0x4, fixed_abs, tag = 'smem constant byte address 0x4 - core index']
  #allocation1 [shape = 'u32[144,128]{1,0:T(1,128)}', space=vmem, size = 0x12000, scoped, tag = 'internal scratch']
  %s0 = inlined_call_operand.hbm [shape: f32[8,32], index: 0, kind: input, shape index: {}]
  %s1 = inlined_call_operand.hbm [shape: f32[32,32], index: 1, kind: input, shape index: {}]
  %s2 = inlined_call_operand.vmem [shape: f32[1,32], index: 2, kind: input, shape index: {}]
  %s3 = inlined_call_operand.vmem [shape: f32[1,32], index: 3, kind: input, shape index: {}]
  %s4 = inlined_call_operand.vmem [shape: f32[1,32], index: 4, kind: input, shape index: {}]
  %s5 = inlined_call_operand.hbm [shape: f32[8,32], index: 5, kind: output, shape index: {}]
  %s6 = sld [smem:[#allocation0]]
  $region38: #{tpu_custom_call.1} parent=0
    _
  %s8 = ssub.s32 1, %s6
  %s9 = scalar_select 0, %s8, %s6
  $region1: #{tpu_custom_call.1} parent=0
    #allocation2 [shape = 'u8[4096]{0}', space=vmem, size = 0x1000, scoped, tag = 'input window, operand 0, single buffered']
    #allocation3 [shape = 's32[1]{0}', space=sflag, size = 0x4, scoped, tag = 'scoped memory for tpu_custom_call.1']
    #allocation4 [shape = 's32[1]{0}', space=sflag, size = 0x4, scoped, tag = 'scoped memory for tpu_custom_call.1']
    #allocation5 [shape = 'u8[16384]{0}', space=vmem, size = 0x4000, scoped, tag = 'input window, operand 1, single buffered']
    #allocation6 [shape = 's32[1]{0}', space=sflag, size = 0x4, scoped, tag = 'scoped memory for tpu_custom_call.1']
    #allocation7 [shape = 'u8[4096]{0}', space=vmem, size = 0x1000, scoped, tag = 'output window, operand 0, single buffered']
    %10 = vsyncpa [#allocation3], 0
    %11 = vsyncpa [#allocation6], 0
    %12 = vsyncpa [#allocation4], 0
    // Predicated region
    $region2: #{tpu_custom_call.1} parent=1 // pred_check
      _
    $region3: #{tpu_custom_call.1} parent=1 // pred_check_branch
      %14 = sbr.rel (0) target = $region5
    $region4: #{tpu_custom_call.1} parent=1 // pred_region
      %s16 = ssub.s32 128, 128
      %17 = vsyncadd [#allocation3], %s16
      %s19 = sshll.u32 [#allocation2], 4
      %s20 = int_to_ptr.vmem [resolvable:$true] %s19
      %22 = dma.hbm_to_vmem [thread:$0]  %s0, 128, %s20, [#allocation3]
    $region5: #{tpu_custom_call.1} parent=1 // pred_fallthru
      _
    // Predicated region
    $region6: #{tpu_custom_call.1} parent=1 // pred_check
      _
    $region7: #{tpu_custom_call.1} parent=1 // pred_check_branch
      %24 = sbr.rel (0) target = $region9
    $region8: #{tpu_custom_call.1} parent=1 // pred_region
      %s26 = ssub.s32 512, 512
      %27 = vsyncadd [#allocation6], %s26
      %s28 = sshll.u32 [#allocation5], 4
      %s29 = int_to_ptr.vmem [resolvable:$true] %s28
      %34 = dma.hbm_to_vmem [thread:$0]  %s1, 512, %s29, [#allocation6], 128, 128, 8
    $region9: #{tpu_custom_call.1} parent=1 // pred_fallthru
      _
    // Predicated region
    $region10: #{tpu_custom_call.1} parent=1 // pred_check
      _
    $region11: #{tpu_custom_call.1} parent=1 // pred_check_branch
      %36 = sbr.rel (0) target = $region13
    $region12: #{tpu_custom_call.1} parent=1 // pred_region
      _
    $region13: #{tpu_custom_call.1} parent=1 // pred_fallthru
      _
    // Predicated region
    $region14: #{tpu_custom_call.1} parent=1 // pred_check
      _
    $region15: #{tpu_custom_call.1} parent=1 // pred_check_branch
      %38 = sbr.rel (0) target = $region17
    $region16: #{tpu_custom_call.1} parent=1 // pred_region
      _
    $region17: #{tpu_custom_call.1} parent=1 // pred_fallthru
      _
    // Predicated region
    $region18: #{tpu_custom_call.1} parent=1 // pred_check
      _
    $region19: #{tpu_custom_call.1} parent=1 // pred_check_branch
      %40 = sbr.rel (0) target = $region21
    $region20: #{tpu_custom_call.1} parent=1 // pred_region
      _
    $region21: #{tpu_custom_call.1} parent=1 // pred_fallthru
      _
    // Predicated region
    $region22: #{tpu_custom_call.1} parent=1 // pred_check
      _
    $region23: #{tpu_custom_call.1} parent=1 // pred_check_branch
      %42 = sbr.rel (0) target = $region25
    $region24: #{tpu_custom_call.1} parent=1 // pred_region
      %43 = dma.done [#allocation3], 128
    $region25: #{tpu_custom_call.1} parent=1 // pred_fallthru
      _
    // Predicated region
    $region26: #{tpu_custom_call.1} parent=1 // pred_check
      _
    $region27: #{tpu_custom_call.1} parent=1 // pred_check_branch
      %45 = sbr.rel (0) target = $region29
    $region28: #{tpu_custom_call.1} parent=1 // pred_region
      %46 = dma.done [#allocation6], 512
    $region29: #{tpu_custom_call.1} parent=1 // pred_fallthru
      _
    %v47 = vld [vmem:[#allocation2] sm:$0xff]
    %v48 = vld [vmem:[#allocation5] sm:$0xff]
    %v49 = vld [vmem:[#allocation5 + $0x8] sm:$0xff]
    %v50 = vld [vmem:[#allocation5 + $0x10] sm:$0xff]
    %v51 = vld [vmem:[#allocation5 + $0x18] sm:$0xff]
    %v52 = vld [vmem:[%s2] sm:$0x1]
    %v53 = vld [vmem:[%s3] sm:$0x1]
    %v54 = vld [vmem:[%s4] sm:$0x1]
    %v56 = vlaneseq
    %v57 = vshrl.u32 %v56, 7
    %v58 = vsub.s32 0, %v57
    %v59 = vrot.slane %v52, %v58
    %vm61 = vcmask 261120
    %v63 = vsel %vm61, %v47, 0
    %65 = vmatprep.subr.mxu0 0.0
    %66 = vmatpush1.msra.mxu0 0.0
    %67 = vmatprep.subr.mxu0 0.0
    %68 = vmatpush1.msra.mxu0 0.0
    %69 = vmatprep.subr.mxu0 0.0
    %70 = vmatpush1.msra.mxu0 0.0
    %71 = vmatprep.subr.mxu0 0.0
    %72 = vmatpush1.msra.mxu0 0.0
    %73 = vmatprep.subr.mxu0 0.0
    %74 = vmatpush1.msra.mxu0 0.0
    %75 = vmatprep.subr.mxu0 0.0
    %76 = vmatpush1.msra.mxu0 0.0
    %77 = vmatprep.subr.mxu0 0.0
    %78 = vmatpush1.msra.mxu0 0.0
    %79 = vmatprep.subr.mxu0 0.0
    %80 = vmatpush1.msra.mxu0 0.0
    %81 = vmatprep.subr.mxu0 0.0
    %82 = vmatpush1.msra.mxu0 0.0
    %83 = vmatprep.subr.mxu0 0.0
    %84 = vmatpush1.msra.mxu0 0.0
    %85 = vmatprep.subr.mxu0 0.0
    %86 = vmatpush1.msra.mxu0 0.0
    %87 = vmatprep.subr.mxu0 0.0
    %88 = vmatpush1.msra.mxu0 0.0
    %89 = vmatprep.subr.mxu0 0.0
    %90 = vmatpush1.msra.mxu0 %v51
    %91 = vmatprep.subr.mxu0 0.0
    %92 = vmatpush1.msra.mxu0 %v50
    %93 = vmatprep.subr.mxu0 0.0
    %94 = vmatpush1.msra.mxu0 %v49
    %95 = vmatprep.subr.mxu0 0.0
    %96 = vmatpush1.msra.mxu0 %v48
    %97 = vmatprep.subr.mxu0 0.0
    %98 = vmatpush2.msra.mxu0 0.0
    %99 = vmatprep.subr.mxu0 0.0
    %100 = vmatpush2.msra.mxu0 0.0
    %101 = vmatprep.subr.mxu0 0.0
    %102 = vmatpush2.msra.mxu0 0.0
    %103 = vmatprep.subr.mxu0 0.0
    %104 = vmatpush2.msra.mxu0 0.0
    %105 = vmatprep.subr.mxu0 0.0
    %106 = vmatpush2.msra.mxu0 0.0
    %107 = vmatprep.subr.mxu0 0.0
    %108 = vmatpush2.msra.mxu0 0.0
    %109 = vmatprep.subr.mxu0 0.0
    %110 = vmatpush2.msra.mxu0 0.0
    %111 = vmatprep.subr.mxu0 0.0
    %112 = vmatpush2.msra.mxu0 0.0
    %113 = vmatprep.subr.mxu0 0.0
    %114 = vmatpush2.msra.mxu0 0.0
    %115 = vmatprep.subr.mxu0 0.0
    %116 = vmatpush2.msra.mxu0 0.0
    %117 = vmatprep.subr.mxu0 0.0
    %118 = vmatpush2.msra.mxu0 0.0
    %119 = vmatprep.subr.mxu0 0.0
    %120 = vmatpush2.msra.mxu0 0.0
    %121 = vmatprep.subr.mxu0 0.0
    %122 = vmatpush2.msra.mxu0 0.0
    %123 = vmatprep.subr.mxu0 0.0
    %124 = vmatpush2.msra.mxu0 0.0
    %125 = vmatprep.subr.mxu0 0.0
    %126 = vmatpush2.msra.mxu0 0.0
    %127 = vmatprep.subr.mxu0 0.0
    %128 = vmatpush2.msra.mxu0 0.0
    %129 = vmatprep.mubr.f32.mxu0 0.0
    %130 = vmatmul.mubr.f32.gmra.mxu0 %v63
    %v131 = vpop.f32.mrf.mxu0
    %v132 = vadd.f32 %v59, %v131
    %v133 = vpop.f32.mrf.mxu0
    %134 = vdwg.mxu0
    %v135 = vmax.f32 %v132, 0.0
    %v136 = vadd.f32 %v47, %v135
    %v137 = vsel %vm61, %v136, 0.0
    %138 = vadd.xlane.f32.xlu0 %v137
    %v139 = vpop.xlane.xlu0 %138
    %v140 = vmul.f32 %v136, %v136
    %v141 = vsel %vm61, %v140, 0.0
    %142 = vadd.xlane.f32.xlu0 %v141
    %v143 = vpop.xlane.xlu0 %142
    %v144 = vmul.f32 %v139, 0.03125
    %v145 = vmul.f32 %v143, 0.03125
    %v146 = vmul.f32 %v144, %v144
    %v147 = vsub.f32 %v145, %v146
    %v148 = vmax.f32 %v147, 0.0
    %v149 = vadd.f32 %v148, 1e-05
    %v150 = vrsqrt.pop %v149
    %v151 = vsub.f32 %v136, %v144
    %v153 = vlaneseq
    %v154 = vshrl.u32 %v153, 7
    %v155 = vsub.s32 0, %v154
    %v156 = vrot.slane %v53, %v155
    %v158 = vmul.f32 %v150, %v156
    %v159 = vmul.f32 %v151, %v158
    %v161 = vlaneseq
    %v162 = vshrl.u32 %v161, 7
    %v163 = vsub.s32 0, %v162
    %v164 = vrot.slane %v54, %v163
    %v166 = vadd.f32 %v159, %v164
    %167 = vst.msk [vmem:[#allocation7] sm:$0xff] %vm61, %v166
    // Predicated region
    $region30: #{tpu_custom_call.1} parent=1 // pred_check
      _
    $region31: #{tpu_custom_call.1} parent=1 // pred_check_branch
      %169 = sbr.rel (0) target = $region33
    $region32: #{tpu_custom_call.1} parent=1 // pred_region
      %s171 = ssub.s32 128, 128
      %172 = vsyncadd [#allocation4], %s171
      %s174 = sshll.u32 [#allocation7], 4
      %s175 = int_to_ptr.vmem [resolvable:$true] %s174
      %177 = dma.vmem_to_hbm [thread:$0]  %s175, 128, %s5, [#allocation4]
    $region33: #{tpu_custom_call.1} parent=1 // pred_fallthru
      _
    // Predicated region
    $region34: #{tpu_custom_call.1} parent=1 // pred_check
      _
    $region35: #{tpu_custom_call.1} parent=1 // pred_check_branch
      %179 = sbr.rel (0) target = $region37
    $region36: #{tpu_custom_call.1} parent=1 // pred_region
      %180 = dma.done [#allocation4], 128
    $region37: #{tpu_custom_call.1} parent=1 // pred_fallthru
      _
    %181 = vsyncpa [#allocation3], 1
    %182 = vsyncpa [#allocation6], 1
    %183 = vsyncpa [#allocation4], 1

// kernel: tpu_custom_call.1
$region0: #{tpu_custom_call.1}
  #allocation0 [shape = 'u32[]', space=smem, size = 0x4, offset = 0x4, fixed_abs, tag = 'smem constant byte address 0x4 - core index']
  #allocation1 [shape = 'u32[144,128]{1,0:T(1,128)}', space=vmem, size = 0x12000, scoped, tag = 'internal scratch']
  %s0 = inlined_call_operand.hbm [shape: f32[8,32], index: 0, kind: input, shape index: {}]
  %s1 = inlined_call_operand.hbm [shape: f32[32,32], index: 1, kind: input, shape index: {}]
  %s2 = inlined_call_operand.vmem [shape: f32[1,32], index: 2, kind: input, shape index: {}]
  %s3 = inlined_call_operand.vmem [shape: f32[1,32], index: 3, kind: input, shape index: {}]
  %s4 = inlined_call_operand.vmem [shape: f32[1,32], index: 4, kind: input, shape index: {}]
  %s5 = inlined_call_operand.hbm [shape: f32[8,32], index: 5, kind: output, shape index: {}]
  %s6 = sld [smem:[#allocation0]]
  $region38: #{tpu_custom_call.1} parent=0
    _
  %s8 = ssub.s32 1, %s6
  %s9 = scalar_select 0, %s8, %s6
  $region1: #{tpu_custom_call.1} parent=0
    #allocation2 [shape = 'u8[4096]{0}', space=vmem, size = 0x1000, scoped, tag = 'input window, operand 0, single buffered']
    #allocation3 [shape = 's32[1]{0}', space=sflag, size = 0x4, scoped, tag = 'scoped memory for tpu_custom_call.1']
    #allocation4 [shape = 's32[1]{0}', space=sflag, size = 0x4, scoped, tag = 'scoped memory for tpu_custom_call.1']
    #allocation5 [shape = 'u8[16384]{0}', space=vmem, size = 0x4000, scoped, tag = 'input window, operand 1, single buffered']
    #allocation6 [shape = 's32[1]{0}', space=sflag, size = 0x4, scoped, tag = 'scoped memory for tpu_custom_call.1']
    #allocation7 [shape = 'u8[4096]{0}', space=vmem, size = 0x1000, scoped, tag = 'output window, operand 0, single buffered']
    %10 = vsyncpa [#allocation3], 0
    %11 = vsyncpa [#allocation6], 0
    %12 = vsyncpa [#allocation4], 0
    // Predicated region
    $region2: #{tpu_custom_call.1} parent=1 // pred_check
      _
    $region3: #{tpu_custom_call.1} parent=1 // pred_check_branch
      %14 = sbr.rel (0) target = $region5
    $region4: #{tpu_custom_call.1} parent=1 // pred_region
      %s16 = ssub.s32 128, 128
      %17 = vsyncadd [#allocation3], %s16
      %s19 = sshll.u32 [#allocation2], 4
      %s20 = int_to_ptr.vmem [resolvable:$true] %s19
      %22 = dma.hbm_to_vmem [thread:$0]  %s0, 128, %s20, [#allocation3]
    $region5: #{tpu_custom_call.1} parent=1 // pred_fallthru
      _
    // Predicated region
    $region6: #{tpu_custom_call.1} parent=1 // pred_check
      _
    $region7: #{tpu_custom_call.1} parent=1 // pred_check_branch
      %24 = sbr.rel (0) target = $region9
    $region8: #{tpu_custom_call.1} parent=1 // pred_region
      %s26 = ssub.s32 512, 512
      %27 = vsyncadd [#allocation6], %s26
      %s28 = sshll.u32 [#allocation5], 4
      %s29 = int_to_ptr.vmem [resolvable:$true] %s28
      %34 = dma.hbm_to_vmem [thread:$0]  %s1, 512, %s29, [#allocation6], 128, 128, 8
    $region9: #{tpu_custom_call.1} parent=1 // pred_fallthru
      _
    // Predicated region
    $region10: #{tpu_custom_call.1} parent=1 // pred_check
      _
    $region11: #{tpu_custom_call.1} parent=1 // pred_check_branch
      %36 = sbr.rel (0) target = $region13
    $region12: #{tpu_custom_call.1} parent=1 // pred_region
      _
    $region13: #{tpu_custom_call.1} parent=1 // pred_fallthru
      _
    // Predicated region
    $region14: #{tpu_custom_call.1} parent=1 // pred_check
      _
    $region15: #{tpu_custom_call.1} parent=1 // pred_check_branch
      %38 = sbr.rel (0) target = $region17
    $region16: #{tpu_custom_call.1} parent=1 // pred_region
      _
    $region17: #{tpu_custom_call.1} parent=1 // pred_fallthru
      _
    // Predicated region
    $region18: #{tpu_custom_call.1} parent=1 // pred_check
      _
    $region19: #{tpu_custom_call.1} parent=1 // pred_check_branch
      %40 = sbr.rel (0) target = $region21
    $region20: #{tpu_custom_call.1} parent=1 // pred_region
      _
    $region21: #{tpu_custom_call.1} parent=1 // pred_fallthru
      _
    // Predicated region
    $region22: #{tpu_custom_call.1} parent=1 // pred_check
      _
    $region23: #{tpu_custom_call.1} parent=1 // pred_check_branch
      %42 = sbr.rel (0) target = $region25
    $region24: #{tpu_custom_call.1} parent=1 // pred_region
      %43 = dma.done [#allocation3], 128
    $region25: #{tpu_custom_call.1} parent=1 // pred_fallthru
      _
    // Predicated region
    $region26: #{tpu_custom_call.1} parent=1 // pred_check
      _
    $region27: #{tpu_custom_call.1} parent=1 // pred_check_branch
      %45 = sbr.rel (0) target = $region29
    $region28: #{tpu_custom_call.1} parent=1 // pred_region
      %46 = dma.done [#allocation6], 512
    $region29: #{tpu_custom_call.1} parent=1 // pred_fallthru
      _
    %v47 = vld [vmem:[#allocation2] sm:$0xff]
    %v48 = vld [vmem:[#allocation5] sm:$0xff]
    %v49 = vld [vmem:[#allocation5 + $0x8] sm:$0xff]
    %v50 = vld [vmem:[#allocation5 + $0x10] sm:$0xff]
    %v51 = vld [vmem:[#allocation5 + $0x18] sm:$0xff]
    %v52 = vld [vmem:[%s2] sm:$0x1]
    %v53 = vld [vmem:[%s3] sm:$0x1]
    %v54 = vld [vmem:[%s4] sm:$0x1]
    %v56 = vlaneseq
    %v57 = vshrl.u32 %v56, 7
    %v58 = vsub.s32 0, %v57
    %v59 = vrot.slane %v52, %v58
    %vm61 = vcmask 261120
    %v63 = vsel %vm61, %v47, 0
    %65 = vmatprep.subr.mxu0 0.0
    %66 = vmatpush1.msra.mxu0 0.0
    %67 = vmatprep.subr.mxu0 0.0
    %68 = vmatpush1.msra.mxu0 0.0
    %69 = vmatprep.subr.mxu0 0.0
    %70 = vmatpush1.msra.mxu0 0.0
    %71 = vmatprep.subr.mxu0 0.0
    %72 = vmatpush1.msra.mxu0 0.0
    %73 = vmatprep.subr.mxu0 0.0
    %74 = vmatpush1.msra.mxu0 0.0
    %75 = vmatprep.subr.mxu0 0.0
    %76 = vmatpush1.msra.mxu0 0.0
    %77 = vmatprep.subr.mxu0 0.0
    %78 = vmatpush1.msra.mxu0 0.0
    %79 = vmatprep.subr.mxu0 0.0
    %80 = vmatpush1.msra.mxu0 0.0
    %81 = vmatprep.subr.mxu0 0.0
    %82 = vmatpush1.msra.mxu0 0.0
    %83 = vmatprep.subr.mxu0 0.0
    %84 = vmatpush1.msra.mxu0 0.0
    %85 = vmatprep.subr.mxu0 0.0
    %86 = vmatpush1.msra.mxu0 0.0
    %87 = vmatprep.subr.mxu0 0.0
    %88 = vmatpush1.msra.mxu0 0.0
    %89 = vmatprep.subr.mxu0 0.0
    %90 = vmatpush1.msra.mxu0 %v51
    %91 = vmatprep.subr.mxu0 0.0
    %92 = vmatpush1.msra.mxu0 %v50
    %93 = vmatprep.subr.mxu0 0.0
    %94 = vmatpush1.msra.mxu0 %v49
    %95 = vmatprep.subr.mxu0 0.0
    %96 = vmatpush1.msra.mxu0 %v48
    %97 = vmatprep.subr.mxu0 0.0
    %98 = vmatpush2.msra.mxu0 0.0
    %99 = vmatprep.subr.mxu0 0.0
    %100 = vmatpush2.msra.mxu0 0.0
    %101 = vmatprep.subr.mxu0 0.0
    %102 = vmatpush2.msra.mxu0 0.0
    %103 = vmatprep.subr.mxu0 0.0
    %104 = vmatpush2.msra.mxu0 0.0
    %105 = vmatprep.subr.mxu0 0.0
    %106 = vmatpush2.msra.mxu0 0.0
    %107 = vmatprep.subr.mxu0 0.0
    %108 = vmatpush2.msra.mxu0 0.0
    %109 = vmatprep.subr.mxu0 0.0
    %110 = vmatpush2.msra.mxu0 0.0
    %111 = vmatprep.subr.mxu0 0.0
    %112 = vmatpush2.msra.mxu0 0.0
    %113 = vmatprep.subr.mxu0 0.0
    %114 = vmatpush2.msra.mxu0 0.0
    %115 = vmatprep.subr.mxu0 0.0
    %116 = vmatpush2.msra.mxu0 0.0
    %117 = vmatprep.subr.mxu0 0.0
    %118 = vmatpush2.msra.mxu0 0.0
    %119 = vmatprep.subr.mxu0 0.0
    %120 = vmatpush2.msra.mxu0 0.0
    %121 = vmatprep.subr.mxu0 0.0
    %122 = vmatpush2.msra.mxu0 0.0
    %123 = vmatprep.subr.mxu0 0.0
    %124 = vmatpush2.msra.mxu0 0.0
    %125 = vmatprep.subr.mxu0 0.0
    %126 = vmatpush2.msra.mxu0 0.0
    %127 = vmatprep.subr.mxu0 0.0
    %128 = vmatpush2.msra.mxu0 0.0
    %129 = vmatprep.mubr.f32.mxu0 0.0
    %130 = vmatmul.mubr.f32.gmra.mxu0 %v63
    %v131 = vpop.f32.mrf.mxu0
    %v132 = vadd.f32 %v59, %v131
    %v133 = vpop.f32.mrf.mxu0
    %134 = vdwg.mxu0
    %v135 = vmax.f32 %v132, 0.0
    %v136 = vadd.f32 %v47, %v135
    %v137 = vsel %vm61, %v136, 0.0
    %138 = vadd.xlane.f32.xlu0 %v137
    %v139 = vpop.xlane.xlu0 %138
    %v140 = vmul.f32 %v136, %v136
    %v141 = vsel %vm61, %v140, 0.0
    %142 = vadd.xlane.f32.xlu0 %v141
    %v143 = vpop.xlane.xlu0 %142
    %v144 = vmul.f32 %v139, 0.03125
    %v145 = vmul.f32 %v143, 0.03125
    %v146 = vmul.f32 %v144, %v144
    %v147 = vsub.f32 %v145, %v146
    %v148 = vmax.f32 %v147, 0.0
    %v149 = vadd.f32 %v148, 1e-05
    %v150 = vrsqrt.pop %v149
    %v151 = vsub.f32 %v136, %v144
    %v153 = vlaneseq
    %v154 = vshrl.u32 %v153, 7
    %v155 = vsub.s32 0, %v154
    %v156 = vrot.slane %v53, %v155
    %v158 = vmul.f32 %v150, %v156
    %v159 = vmul.f32 %v151, %v158
    %v161 = vlaneseq
    %v162 = vshrl.u32 %v161, 7
    %v163 = vsub.s32 0, %v162
    %v164 = vrot.slane %v54, %v163
    %v166 = vadd.f32 %v159, %v164
    %167 = vst.msk [vmem:[#allocation7] sm:$0xff] %vm61, %v166
    // Predicated region
    $region30: #{tpu_custom_call.1} parent=1 // pred_check
      _
    $region31: #{tpu_custom_call.1} parent=1 // pred_check_branch
      %169 = sbr.rel (0) target = $region33
    $region32: #{tpu_custom_call.1} parent=1 // pred_region
      %s171 = ssub.s32 128, 128
      %172 = vsyncadd [#allocation4], %s171
      %s174 = sshll.u32 [#allocation7], 4
      %s175 = int_to_ptr.vmem [resolvable:$true] %s174
      %177 = dma.vmem_to_hbm [thread:$0]  %s175, 128, %s5, [#allocation4]
    $region33: #{tpu_custom_call.1} parent=1 // pred_fallthru
      _
    // Predicated region
    $region34: #{tpu_custom_call.1} parent=1 // pred_check
      _
    $region35: #{tpu_custom_call.1} parent=1 // pred_check_branch
      %179 = sbr.rel (0) target = $region37
    $region36: #{tpu_custom_call.1} parent=1 // pred_region
      %180 = dma.done [#allocation4], 128
    $region37: #{tpu_custom_call.1} parent=1 // pred_fallthru
      _
    %181 = vsyncpa [#allocation3], 1
    %182 = vsyncpa [#allocation6], 1
    %183 = vsyncpa [#allocation4], 1

</llo_original>
